<compile_context>
chip_gen: v5e
topology: v5e:2x2
jax: 0.10.0
libtpu: 0.0.40
codegen_flags: <defaults>
</compile_context>

<pallas_src>
import math
import jax
import jax.numpy as jnp
from jax.experimental import pallas as pl
from jax.experimental.pallas import tpu as pltpu

HIDDEN = 128
LANE = 128  # final-layer output columns padded up to a multiple of one lane width

_TM_BUCKETS = (16, 64, 256, 512)


def _pick_tm(batch):
    """Row-tile size from a fixed bucket set (avoids per-B recompiles).

    - B <= 16: one minimal 16-row tile (16 satisfies bf16 sublane packing).
    - B  > 16: largest bucket <= round_up(ceil(B/2), 16) so there are always
      at least two tiles -> megacore split on v7x, and 512-row tiles for
      large batches to amortize the ~0.35 us per-grid-step overhead.
    """
    if batch <= 16:
        return 16
    half = ((-(-batch // 2)) + 15) // 16 * 16  # round_up(cdiv(B, 2), 16)
    tm = 16
    for b in _TM_BUCKETS:
        if b <= half:
            tm = b
    return tm


def dqn_kernel(x_ref, w1_ref, b1_ref, w2_ref, b2_ref, w3_ref, b3_ref, o_ref):
    # x arrives as f32 straight from HBM (no separate wrapper cast/pad pass);
    # cast to bf16 in-register for the MXU, accumulate in f32, bias+ReLU in f32.
    x = x_ref[...].astype(jnp.bfloat16)                                   # (TM, in)
    h1 = jnp.dot(x, w1_ref[...], preferred_element_type=jnp.float32) + b1_ref[...]
    h1 = jnp.maximum(h1, 0.0).astype(jnp.bfloat16)                        # (TM, 128)
    h2 = jnp.dot(h1, w2_ref[...], preferred_element_type=jnp.float32) + b2_ref[...]
    h2 = jnp.maximum(h2, 0.0).astype(jnp.bfloat16)                        # (TM, 128)
    out = jnp.dot(h2, w3_ref[...], preferred_element_type=jnp.float32) + b3_ref[...]
    o_ref[...] = out.astype(o_ref.dtype)                                  # (TM, n_out) bf16, lane-dense


def init_dqn_params(key, input_dim, output_dim, hidden=HIDDEN):
    """PyTorch nn.Linear-style init U[-1/sqrt(fan_in), 1/sqrt(fan_in)].
    Weights stored transposed: (in_features, out_features)."""
    ks = jax.random.split(key, 6)

    def linear(kw, kb, fan_in, fan_out):
        bound = 1.0 / math.sqrt(fan_in)
        w = jax.random.uniform(kw, (fan_in, fan_out), jnp.float32, -bound, bound)
        b = jax.random.uniform(kb, (1, fan_out), jnp.float32, -bound, bound)
        return w, b

    w1, b1 = linear(ks[0], ks[1], input_dim, hidden)
    w2, b2 = linear(ks[2], ks[3], hidden, hidden)
    w3, b3 = linear(ks[4], ks[5], hidden, output_dim)
    return {"w1": w1, "b1": b1, "w2": w2, "b2": b2, "w3": w3, "b3": b3}


def prepare_params(params):
    """One-time prep: cast weights to bf16 (MXU-native) and zero-pad the final
    layer's output columns up to a multiple of LANE=128 for lane-dense stores."""
    out_dim = params["w3"].shape[1]
    n_out = ((out_dim + LANE - 1) // LANE) * LANE
    pad_n = n_out - out_dim
    w3 = jnp.pad(params["w3"], ((0, 0), (0, pad_n)))
    b3 = jnp.pad(params["b3"], ((0, 0), (0, pad_n)))
    return {
        "w1": params["w1"].astype(jnp.bfloat16),
        "b1": params["b1"].astype(jnp.float32),
        "w2": params["w2"].astype(jnp.bfloat16),
        "b2": params["b2"].astype(jnp.float32),
        "w3": w3.astype(jnp.bfloat16),
        "b3": b3.astype(jnp.float32),
        "out_dim": out_dim,
    }


def dqn_forward(x, prep, tm=None):
    """x: (B, input_dim) f32. prep: output of prepare_params. Returns (B, out_dim) f32."""
    B, in_dim = x.shape
    out_dim = prep["out_dim"]
    n_out = prep["w3"].shape[1]

    if tm is None:
        tm = _pick_tm(B)
    n_tiles = pl.cdiv(B, tm)  # ragged last tile handled by Pallas (masked OOB stores)

    resident = lambda shape: pl.BlockSpec(shape, lambda i: (0, 0))  # VMEM-resident across grid

    out = pl.pallas_call(
        dqn_kernel,
        out_shape=jax.ShapeDtypeStruct((B, n_out), jnp.bfloat16),
        grid=(n_tiles,),
        in_specs=[
            pl.BlockSpec((tm, in_dim), lambda i: (i, 0)),           # batch-tiled x (f32)
            resident((in_dim, HIDDEN)), resident((1, HIDDEN)),
            resident((HIDDEN, HIDDEN)), resident((1, HIDDEN)),
            resident((HIDDEN, n_out)),  resident((1, n_out)),
        ],
        out_specs=pl.BlockSpec((tm, n_out), lambda i: (i, 0)),
        compiler_params=pltpu.CompilerParams(
            dimension_semantics=("parallel",),          # v7x: batch tiles split across the 2 TCs
            vmem_limit_bytes=32 * 1024 * 1024,          # safe on v7x's 64 MiB physical VMEM
        ),
    )(x, prep["w1"], prep["b1"], prep["w2"], prep["b2"], prep["w3"], prep["b3"])

    # Padded garbage rows (ragged last tile) are never written back; only the
    # real out_dim columns are returned. Cast back to f32 once, outside.
    return out[:, :out_dim].astype(jnp.float32)


def dqn_reference_bf16(x, p):
    """Reference matching the kernel's numerics (bf16 operands, f32 accumulate)."""
    xb = x.astype(jnp.bfloat16)
    w1 = p["w1"].astype(jnp.bfloat16)
    w2 = p["w2"].astype(jnp.bfloat16)
    w3 = p["w3"].astype(jnp.bfloat16)
    h1 = jnp.maximum(jnp.dot(xb, w1, preferred_element_type=jnp.float32) + p["b1"], 0.0)
    h1 = h1.astype(jnp.bfloat16)
    h2 = jnp.maximum(jnp.dot(h1, w2, preferred_element_type=jnp.float32) + p["b2"], 0.0)
    h2 = h2.astype(jnp.bfloat16)
    return jnp.dot(h2, w3, preferred_element_type=jnp.float32) + p["b3"]


if __name__ == "__main__":
    key = jax.random.PRNGKey(0)
    k_x, k_p = jax.random.split(key)

    batch, input_dim, output_dim = 2, 16, 4
    x = jax.random.normal(k_x, (batch, input_dim), jnp.float32)
    params = init_dqn_params(k_p, input_dim, output_dim)

    prep = prepare_params(params)
    out = dqn_forward(x, prep)
    out = jax.block_until_ready(out)

    ref = dqn_reference_bf16(x, params)
    assert out.shape == (batch, output_dim), f"bad shape {out.shape}"
    assert jnp.allclose(out, ref, atol=2e-2, rtol=2e-2), "mismatch vs reference"

    print("KERNEL_OK")
</pallas_src>

<mosaic_0001>
module attributes {stable_mosaic.version = 11 : i64} {
  func.func @dqn_kernel(%arg0: i32, %arg1: memref<16x16xf32, #tpu.memory_space<vmem>>, %arg2: memref<16x128xbf16, #tpu.memory_space<vmem>>, %arg3: memref<1x128xf32, #tpu.memory_space<vmem>>, %arg4: memref<128x128xbf16, #tpu.memory_space<vmem>>, %arg5: memref<1x128xf32, #tpu.memory_space<vmem>>, %arg6: memref<128x128xbf16, #tpu.memory_space<vmem>>, %arg7: memref<1x128xf32, #tpu.memory_space<vmem>>, %arg8: memref<16x128xbf16, #tpu.memory_space<vmem>>) attributes {dimension_semantics = [#tpu.dimension_semantics<parallel>], iteration_bounds = array<i64: 1>, scalar_prefetch = 0 : i64, scratch_operands = 0 : i64, tpu.core_type = #tpu.core_type<tc>, window_params = [{transform_indices = @transform_0, window_bounds = array<i64: 16, 16>}, {pipeline_mode = #tpu.pipeline_mode<synchronous>, transform_indices = @transform_1, window_bounds = array<i64: 16, 128>}, {pipeline_mode = #tpu.pipeline_mode<synchronous>, transform_indices = @transform_2, window_bounds = array<i64: 1, 128>}, {pipeline_mode = #tpu.pipeline_mode<synchronous>, transform_indices = @transform_3, window_bounds = array<i64: 128, 128>}, {pipeline_mode = #tpu.pipeline_mode<synchronous>, transform_indices = @transform_4, window_bounds = array<i64: 1, 128>}, {pipeline_mode = #tpu.pipeline_mode<synchronous>, transform_indices = @transform_5, window_bounds = array<i64: 128, 128>}, {pipeline_mode = #tpu.pipeline_mode<synchronous>, transform_indices = @transform_6, window_bounds = array<i64: 1, 128>}, {transform_indices = @transform_7, window_bounds = array<i64: 16, 128>}]} {
    %c0 = arith.constant 0 : index
    %c0_0 = arith.constant 0 : index
    %0 = vector.load %arg1[%c0, %c0_0] : memref<16x16xf32, #tpu.memory_space<vmem>>, vector<16x16xf32>
    %1 = arith.truncf %0 : vector<16x16xf32> to vector<16x16xbf16>
    %c0_1 = arith.constant 0 : index
    %c0_2 = arith.constant 0 : index
    %2 = vector.load %arg2[%c0_1, %c0_2] : memref<16x128xbf16, #tpu.memory_space<vmem>>, vector<16x128xbf16>
    %cst = arith.constant dense<0.000000e+00> : vector<16x128xf32>
    %3 = tpu.matmul %1, %2, %cst {dimension_numbers = #tpu.dot_dimension_numbers<[1], [0], [0], [1], [0, 0, 1, 1], [], []>} : vector<16x16xbf16>, vector<16x128xbf16>, vector<16x128xf32> -> vector<16x128xf32>
    %c0_3 = arith.constant 0 : index
    %c0_4 = arith.constant 0 : index
    %4 = vector.load %arg3[%c0_3, %c0_4] : memref<1x128xf32, #tpu.memory_space<vmem>>, vector<1x128xf32>
    %5 = vector.broadcast %4 : vector<1x128xf32> to vector<16x128xf32>
    %6 = arith.addf %3, %5 : vector<16x128xf32>
    %cst_5 = arith.constant 0.000000e+00 : f32
    %7 = vector.broadcast %cst_5 : f32 to vector<16x128xf32>
    %8 = arith.maximumf %6, %7 : vector<16x128xf32>
    %9 = arith.truncf %8 : vector<16x128xf32> to vector<16x128xbf16>
    %c0_6 = arith.constant 0 : index
    %c0_7 = arith.constant 0 : index
    %10 = vector.load %arg4[%c0_6, %c0_7] : memref<128x128xbf16, #tpu.memory_space<vmem>>, vector<128x128xbf16>
    %cst_8 = arith.constant dense<0.000000e+00> : vector<16x128xf32>
    %11 = tpu.matmul %9, %10, %cst_8 {dimension_numbers = #tpu.dot_dimension_numbers<[1], [0], [0], [1], [0, 0, 1, 1], [], []>} : vector<16x128xbf16>, vector<128x128xbf16>, vector<16x128xf32> -> vector<16x128xf32>
    %c0_9 = arith.constant 0 : index
    %c0_10 = arith.constant 0 : index
    %12 = vector.load %arg5[%c0_9, %c0_10] : memref<1x128xf32, #tpu.memory_space<vmem>>, vector<1x128xf32>
    %13 = vector.broadcast %12 : vector<1x128xf32> to vector<16x128xf32>
    %14 = arith.addf %11, %13 : vector<16x128xf32>
    %cst_11 = arith.constant 0.000000e+00 : f32
    %15 = vector.broadcast %cst_11 : f32 to vector<16x128xf32>
    %16 = arith.maximumf %14, %15 : vector<16x128xf32>
    %17 = arith.truncf %16 : vector<16x128xf32> to vector<16x128xbf16>
    %c0_12 = arith.constant 0 : index
    %c0_13 = arith.constant 0 : index
    %18 = vector.load %arg6[%c0_12, %c0_13] : memref<128x128xbf16, #tpu.memory_space<vmem>>, vector<128x128xbf16>
    %cst_14 = arith.constant dense<0.000000e+00> : vector<16x128xf32>
    %19 = tpu.matmul %17, %18, %cst_14 {dimension_numbers = #tpu.dot_dimension_numbers<[1], [0], [0], [1], [0, 0, 1, 1], [], []>} : vector<16x128xbf16>, vector<128x128xbf16>, vector<16x128xf32> -> vector<16x128xf32>
    %c0_15 = arith.constant 0 : index
    %c0_16 = arith.constant 0 : index
    %20 = vector.load %arg7[%c0_15, %c0_16] : memref<1x128xf32, #tpu.memory_space<vmem>>, vector<1x128xf32>
    %21 = vector.broadcast %20 : vector<1x128xf32> to vector<16x128xf32>
    %22 = arith.addf %19, %21 : vector<16x128xf32>
    %23 = arith.truncf %22 : vector<16x128xf32> to vector<16x128xbf16>
    %c0_17 = arith.constant 0 : index
    %c0_18 = arith.constant 0 : index
    %24 = vector.load %arg8[%c0_17, %c0_18] : memref<16x128xbf16, #tpu.memory_space<vmem>>, vector<16x128xbf16>
    tpu.vector_store %arg8[%c0_17, %c0_18], %23 {strides = array<i32>} : memref<16x128xbf16, #tpu.memory_space<vmem>>, vector<16x128xbf16>,
    return
  }
  func.func @transform_0(%arg0: i32) -> (i32, i32) {
    %c0_i32 = arith.constant 0 : i32
    %c0_i32_0 = arith.constant 0 : i32
    return %arg0, %c0_i32 : i32, i32
  }
  func.func @transform_1(%arg0: i32) -> (i32, i32) {
    %c0_i32 = arith.constant 0 : i32
    %c0_i32_0 = arith.constant 0 : i32
    %c0_i32_1 = arith.constant 0 : i32
    return %c0_i32, %c0_i32_0 : i32, i32
  }
  func.func @transform_2(%arg0: i32) -> (i32, i32) {
    %c0_i32 = arith.constant 0 : i32
    %c0_i32_0 = arith.constant 0 : i32
    %c0_i32_1 = arith.constant 0 : i32
    return %c0_i32, %c0_i32_0 : i32, i32
  }
  func.func @transform_3(%arg0: i32) -> (i32, i32) {
    %c0_i32 = arith.constant 0 : i32
    %c0_i32_0 = arith.constant 0 : i32
    %c0_i32_1 = arith.constant 0 : i32
    return %c0_i32, %c0_i32_0 : i32, i32
  }
  func.func @transform_4(%arg0: i32) -> (i32, i32) {
    %c0_i32 = arith.constant 0 : i32
    %c0_i32_0 = arith.constant 0 : i32
    %c0_i32_1 = arith.constant 0 : i32
    return %c0_i32, %c0_i32_0 : i32, i32
  }
  func.func @transform_5(%arg0: i32) -> (i32, i32) {
    %c0_i32 = arith.constant 0 : i32
    %c0_i32_0 = arith.constant 0 : i32
    %c0_i32_1 = arith.constant 0 : i32
    return %c0_i32, %c0_i32_0 : i32, i32
  }
  func.func @transform_6(%arg0: i32) -> (i32, i32) {
    %c0_i32 = arith.constant 0 : i32
    %c0_i32_0 = arith.constant 0 : i32
    %c0_i32_1 = arith.constant 0 : i32
    return %c0_i32, %c0_i32_0 : i32, i32
  }
  func.func @transform_7(%arg0: i32) -> (i32, i32) {
    %c0_i32 = arith.constant 0 : i32
    %c0_i32_0 = arith.constant 0 : i32
    return %arg0, %c0_i32 : i32, i32
  }
}

</mosaic_0001>

<llo_original>
// kernel: tpu_custom_call.1
$region0: #{tpu_custom_call.1}
  #allocation0 [shape = 'u32[]', space=smem, size = 0x4, offset = 0x4, fixed_abs, tag = 'smem constant byte address 0x4 - core index']
  #allocation1 [shape = 'u32[72,128]{1,0:T(1,128)}', space=vmem, size = 0x9000, scoped, tag = 'internal scratch']
  %s0 = inlined_call_operand.hbm [shape: f32[2,16], index: 0, kind: input, shape index: {}]
  %s1 = inlined_call_operand.hbm [shape: bf16[16,128], index: 1, kind: input, shape index: {}]
  %s2 = inlined_call_operand.vmem [shape: f32[1,128], index: 2, kind: input, shape index: {}]
  %s3 = inlined_call_operand.hbm [shape: bf16[128,128], index: 3, kind: input, shape index: {}]
  %s4 = inlined_call_operand.vmem [shape: f32[1,128], index: 4, kind: input, shape index: {}]
  %s5 = inlined_call_operand.hbm [shape: bf16[128,128], index: 5, kind: input, shape index: {}]
  %s6 = inlined_call_operand.vmem [shape: f32[1,128], index: 6, kind: input, shape index: {}]
  %s7 = inlined_call_operand.hbm [shape: bf16[2,128], index: 7, kind: output, shape index: {}]
  %s8 = sld [smem:[#allocation0]]
  $region54: #{tpu_custom_call.1} parent=0
    _
  %s10 = ssub.s32 1, %s8
  %s11 = scalar_select 0, %s10, %s8
  $region1: #{tpu_custom_call.1} parent=0
    #allocation2 [shape = 'u8[8192]{0}', space=vmem, size = 0x2000, scoped, tag = 'input window, operand 0, single buffered']
    #allocation3 [shape = 's32[1]{0}', space=sflag, size = 0x4, scoped, tag = 'scoped memory for tpu_custom_call.1']
    #allocation4 [shape = 's32[1]{0}', space=sflag, size = 0x4, scoped, tag = 'scoped memory for tpu_custom_call.1']
    #allocation5 [shape = 'u8[4096]{0}', space=vmem, size = 0x1000, scoped, tag = 'input window, operand 1, single buffered']
    #allocation6 [shape = 's32[1]{0}', space=sflag, size = 0x4, scoped, tag = 'scoped memory for tpu_custom_call.1']
    #allocation7 [shape = 'u8[32768]{0}', space=vmem, size = 0x8000, scoped, tag = 'input window, operand 3, single buffered']
    #allocation8 [shape = 'u8[32768]{0}', space=vmem, size = 0x8000, scoped, tag = 'input window, operand 5, single buffered']
    #allocation9 [shape = 's32[1]{0}', space=sflag, size = 0x4, scoped, tag = 'scoped memory for tpu_custom_call.1']
    #allocation10 [shape = 'u8[4096]{0}', space=vmem, size = 0x1000, scoped, tag = 'output window, operand 0, single buffered']
    %12 = vsyncpa [#allocation3], 0
    %13 = vsyncpa [#allocation6], 0
    %14 = vsyncpa [#allocation9], 0
    %15 = vsyncpa [#allocation4], 0
    // Predicated region
    $region2: #{tpu_custom_call.1} parent=1 // pred_check
      _
    $region3: #{tpu_custom_call.1} parent=1 // pred_check_branch
      %17 = sbr.rel (0) target = $region5
    $region4: #{tpu_custom_call.1} parent=1 // pred_region
      %19 = vsyncadd [#allocation3], 224
      %s20 = sshll.u32 %s0, 4
      %s21 = int_to_ptr.hbm [resolvable:$true] %s20
      %s22 = sshll.u32 [#allocation2], 4
      %s23 = int_to_ptr.vmem [resolvable:$true] %s22
      %28 = dma.hbm_to_vmem [thread:$0]  %s21, 32, %s23, [#allocation3], 32, 32, 2
    $region5: #{tpu_custom_call.1} parent=1 // pred_fallthru
      _
    // Predicated region
    $region6: #{tpu_custom_call.1} parent=1 // pred_check
      _
    $region7: #{tpu_custom_call.1} parent=1 // pred_check_branch
      %30 = sbr.rel (0) target = $region9
    $region8: #{tpu_custom_call.1} parent=1 // pred_region
      %32 = vsyncadd [#allocation6], 0
      %s33 = sshll.u32 %s1, 4
      %s34 = int_to_ptr.hbm [resolvable:$true] %s33
      %s35 = sshll.u32 [#allocation5], 4
      %s36 = int_to_ptr.vmem [resolvable:$true] %s35
      %41 = dma.hbm_to_vmem [thread:$0]  %s34, 128, %s36, [#allocation6], 64, 64, 4
    $region9: #{tpu_custom_call.1} parent=1 // pred_fallthru
      _
    // Predicated region
    $region10: #{tpu_custom_call.1} parent=1 // pred_check
      _
    $region11: #{tpu_custom_call.1} parent=1 // pred_check_branch
      %43 = sbr.rel (0) target = $region13
    $region12: #{tpu_custom_call.1} parent=1 // pred_region
      _
    $region13: #{tpu_custom_call.1} parent=1 // pred_fallthru
      _
    // Predicated region
    $region14: #{tpu_custom_call.1} parent=1 // pred_check
      _
    $region15: #{tpu_custom_call.1} parent=1 // pred_check_branch
      %45 = sbr.rel (0) target = $region17
    $region16: #{tpu_custom_call.1} parent=1 // pred_region
      %47 = vsyncadd [#allocation6], 0
      %s48 = sshll.u32 %s3, 4
      %s49 = int_to_ptr.hbm [resolvable:$true] %s48
      %s50 = sshll.u32 [#allocation7], 4
      %s51 = int_to_ptr.vmem [resolvable:$true] %s50
      %56 = dma.hbm_to_vmem [thread:$0]  %s49, 1024, %s51, [#allocation6], 64, 64, 4
    $region17: #{tpu_custom_call.1} parent=1 // pred_fallthru
      _
    // Predicated region
    $region18: #{tpu_custom_call.1} parent=1 // pred_check
      _
    $region19: #{tpu_custom_call.1} parent=1 // pred_check_branch
      %58 = sbr.rel (0) target = $region21
    $region20: #{tpu_custom_call.1} parent=1 // pred_region
      _
    $region21: #{tpu_custom_call.1} parent=1 // pred_fallthru
      _
    // Predicated region
    $region22: #{tpu_custom_call.1} parent=1 // pred_check
      _
    $region23: #{tpu_custom_call.1} parent=1 // pred_check_branch
      %60 = sbr.rel (0) target = $region25
    $region24: #{tpu_custom_call.1} parent=1 // pred_region
      %62 = vsyncadd [#allocation9], 0
      %s63 = sshll.u32 %s5, 4
      %s64 = int_to_ptr.hbm [resolvable:$true] %s63
      %s65 = sshll.u32 [#allocation8], 4
      %s66 = int_to_ptr.vmem [resolvable:$true] %s65
      %71 = dma.hbm_to_vmem [thread:$0]  %s64, 1024, %s66, [#allocation9], 64, 64, 4
    $region25: #{tpu_custom_call.1} parent=1 // pred_fallthru
      _
    // Predicated region
    $region26: #{tpu_custom_call.1} parent=1 // pred_check
      _
    $region27: #{tpu_custom_call.1} parent=1 // pred_check_branch
      %73 = sbr.rel (0) target = $region29
    $region28: #{tpu_custom_call.1} parent=1 // pred_region
      _
    $region29: #{tpu_custom_call.1} parent=1 // pred_fallthru
      _
    // Predicated region
    $region30: #{tpu_custom_call.1} parent=1 // pred_check
      _
    $region31: #{tpu_custom_call.1} parent=1 // pred_check_branch
      %75 = sbr.rel (0) target = $region33
    $region32: #{tpu_custom_call.1} parent=1 // pred_region
      %77 = dma.done [#allocation3], 256
    $region33: #{tpu_custom_call.1} parent=1 // pred_fallthru
      _
    // Predicated region
    $region34: #{tpu_custom_call.1} parent=1 // pred_check
      _
    $region35: #{tpu_custom_call.1} parent=1 // pred_check_branch
      %79 = sbr.rel (0) target = $region37
    $region36: #{tpu_custom_call.1} parent=1 // pred_region
      %81 = dma.done [#allocation6], 128
    $region37: #{tpu_custom_call.1} parent=1 // pred_fallthru
      _
    // Predicated region
    $region38: #{tpu_custom_call.1} parent=1 // pred_check
      _
    $region39: #{tpu_custom_call.1} parent=1 // pred_check_branch
      %83 = sbr.rel (0) target = $region41
    $region40: #{tpu_custom_call.1} parent=1 // pred_region
      %85 = dma.done [#allocation6], 1024
    $region41: #{tpu_custom_call.1} parent=1 // pred_fallthru
      _
    // Predicated region
    $region42: #{tpu_custom_call.1} parent=1 // pred_check
      _
    $region43: #{tpu_custom_call.1} parent=1 // pred_check_branch
      %87 = sbr.rel (0) target = $region45
    $region44: #{tpu_custom_call.1} parent=1 // pred_region
      %89 = dma.done [#allocation9], 1024
    $region45: #{tpu_custom_call.1} parent=1 // pred_fallthru
      _
    %v91 = vld [vmem:[#allocation2] sm:$0xff]
    %v92 = vld [vmem:[#allocation2 + $0x8] sm:$0xff]
    %v93 = vpack.c.bf16 %v92, %v91
    %v94 = vld [vmem:[#allocation5] sm:$0xf]
    %v95 = vld [vmem:[#allocation5 + $0x4] sm:$0xf]
    %v96 = vld [vmem:[%s2] sm:$0x1]
    %v98 = vperm.slane %v96, 0
    %v102 = vunpack.c.l.b16 %v94
    %v103 = vunpack.c.l.b16 %v95
    %v104 = vpack.c.b16 %v103, %v102
    %vm106 = vcmask 130048
    %v108 = vsel %vm106, %v93, 0
    %110 = vmatpush.bf16.msra.mxu0 0
    %111 = vmatpush.bf16.msra.mxu0 0
    %112 = vmatpush.bf16.msra.mxu0 0
    %113 = vmatpush.bf16.msra.mxu0 0
    %114 = vmatpush.bf16.msra.mxu0 0
    %115 = vmatpush.bf16.msra.mxu0 0
    %116 = vmatpush.bf16.msra.mxu0 0
    %117 = vmatpush.bf16.msra.mxu0 %v104
    %118 = vmatmul.bf16.gmra.mxu0 %v108
    %v119 = vpop.f32.mrf.mxu0
    %v120 = vadd.f32 %v98, %v119
    %v121 = vpop.f32.mrf.mxu0
    %v122 = vadd.f32 %v98, %v121
    %123 = vdwg.mxu0
    %v124 = vmax.f32 %v120, 0.0
    %v125 = vmax.f32 %v122, 0.0
    %v126 = vpack.c.bf16 %v125, %v124
    %v127 = vld [vmem:[#allocation7] sm:$0xf]
    %v128 = vld [vmem:[#allocation7 + $0x4] sm:$0xf]
    %v129 = vld [vmem:[#allocation7 + $0x8] sm:$0xf]
    %v130 = vld [vmem:[#allocation7 + $0xc] sm:$0xf]
    %v131 = vld [vmem:[#allocation7 + $0x10] sm:$0xf]
    %v132 = vld [vmem:[#allocation7 + $0x14] sm:$0xf]
    %v133 = vld [vmem:[#allocation7 + $0x18] sm:$0xf]
    %v134 = vld [vmem:[#allocation7 + $0x1c] sm:$0xf]
    %v135 = vld [vmem:[#allocation7 + $0x20] sm:$0xf]
    %v136 = vld [vmem:[#allocation7 + $0x24] sm:$0xf]
    %v137 = vld [vmem:[#allocation7 + $0x28] sm:$0xf]
    %v138 = vld [vmem:[#allocation7 + $0x2c] sm:$0xf]
    %v139 = vld [vmem:[#allocation7 + $0x30] sm:$0xf]
    %v140 = vld [vmem:[#allocation7 + $0x34] sm:$0xf]
    %v141 = vld [vmem:[#allocation7 + $0x38] sm:$0xf]
    %v142 = vld [vmem:[#allocation7 + $0x3c] sm:$0xf]
    %v143 = vld [vmem:[%s4] sm:$0x1]
    %v145 = vperm.slane %v143, 0
    %v163 = vunpack.c.l.b16 %v127
    %v164 = vunpack.c.l.b16 %v128
    %v165 = vunpack.c.l.b16 %v129
    %v166 = vunpack.c.l.b16 %v130
    %v167 = vunpack.c.l.b16 %v131
    %v168 = vunpack.c.l.b16 %v132
    %v169 = vunpack.c.l.b16 %v133
    %v170 = vunpack.c.l.b16 %v134
    %v171 = vunpack.c.l.b16 %v135
    %v172 = vunpack.c.l.b16 %v136
    %v173 = vunpack.c.l.b16 %v137
    %v174 = vunpack.c.l.b16 %v138
    %v175 = vunpack.c.l.b16 %v139
    %v176 = vunpack.c.l.b16 %v140
    %v177 = vunpack.c.l.b16 %v141
    %v178 = vunpack.c.l.b16 %v142
    %v179 = vpack.c.b16 %v164, %v163
    %v180 = vpack.c.b16 %v166, %v165
    %v181 = vpack.c.b16 %v168, %v167
    %v182 = vpack.c.b16 %v170, %v169
    %v183 = vpack.c.b16 %v172, %v171
    %v184 = vpack.c.b16 %v174, %v173
    %v185 = vpack.c.b16 %v176, %v175
    %v186 = vpack.c.b16 %v178, %v177
    %195 = vmatpush.bf16.msra.mxu0 %v186
    %196 = vmatpush.bf16.msra.mxu0 %v185
    %197 = vmatpush.bf16.msra.mxu0 %v184
    %198 = vmatpush.bf16.msra.mxu0 %v183
    %199 = vmatpush.bf16.msra.mxu0 %v182
    %200 = vmatpush.bf16.msra.mxu0 %v181
    %201 = vmatpush.bf16.msra.mxu0 %v180
    %202 = vmatpush.bf16.msra.mxu0 %v179
    %203 = vmatmul.bf16.gmra.mxu0 %v126
    %v204 = vpop.f32.mrf.mxu0
    %v205 = vadd.f32 %v145, %v204
    %v206 = vpop.f32.mrf.mxu0
    %v207 = vadd.f32 %v145, %v206
    %208 = vdwg.mxu0
    %v209 = vmax.f32 %v205, 0.0
    %v210 = vmax.f32 %v207, 0.0
    %v211 = vpack.c.bf16 %v210, %v209
    %v212 = vld [vmem:[#allocation8] sm:$0xf]
    %v213 = vld [vmem:[#allocation8 + $0x4] sm:$0xf]
    %v214 = vld [vmem:[#allocation8 + $0x8] sm:$0xf]
    %v215 = vld [vmem:[#allocation8 + $0xc] sm:$0xf]
    %v216 = vld [vmem:[#allocation8 + $0x10] sm:$0xf]
    %v217 = vld [vmem:[#allocation8 + $0x14] sm:$0xf]
    %v218 = vld [vmem:[#allocation8 + $0x18] sm:$0xf]
    %v219 = vld [vmem:[#allocation8 + $0x1c] sm:$0xf]
    %v220 = vld [vmem:[#allocation8 + $0x20] sm:$0xf]
    %v221 = vld [vmem:[#allocation8 + $0x24] sm:$0xf]
    %v222 = vld [vmem:[#allocation8 + $0x28] sm:$0xf]
    %v223 = vld [vmem:[#allocation8 + $0x2c] sm:$0xf]
    %v224 = vld [vmem:[#allocation8 + $0x30] sm:$0xf]
    %v225 = vld [vmem:[#allocation8 + $0x34] sm:$0xf]
    %v226 = vld [vmem:[#allocation8 + $0x38] sm:$0xf]
    %v227 = vld [vmem:[#allocation8 + $0x3c] sm:$0xf]
    %v228 = vld [vmem:[%s6] sm:$0x1]
    %v230 = vperm.slane %v228, 0
    %v248 = vunpack.c.l.b16 %v212
    %v249 = vunpack.c.l.b16 %v213
    %v250 = vunpack.c.l.b16 %v214
    %v251 = vunpack.c.l.b16 %v215
    %v252 = vunpack.c.l.b16 %v216
    %v253 = vunpack.c.l.b16 %v217
    %v254 = vunpack.c.l.b16 %v218
    %v255 = vunpack.c.l.b16 %v219
    %v256 = vunpack.c.l.b16 %v220
    %v257 = vunpack.c.l.b16 %v221
    %v258 = vunpack.c.l.b16 %v222
    %v259 = vunpack.c.l.b16 %v223
    %v260 = vunpack.c.l.b16 %v224
    %v261 = vunpack.c.l.b16 %v225
    %v262 = vunpack.c.l.b16 %v226
    %v263 = vunpack.c.l.b16 %v227
    %v264 = vpack.c.b16 %v249, %v248
    %v265 = vpack.c.b16 %v251, %v250
    %v266 = vpack.c.b16 %v253, %v252
    %v267 = vpack.c.b16 %v255, %v254
    %v268 = vpack.c.b16 %v257, %v256
    %v269 = vpack.c.b16 %v259, %v258
    %v270 = vpack.c.b16 %v261, %v260
    %v271 = vpack.c.b16 %v263, %v262
    %280 = vmatpush.bf16.msra.mxu0 %v271
    %281 = vmatpush.bf16.msra.mxu0 %v270
    %282 = vmatpush.bf16.msra.mxu0 %v269
    %283 = vmatpush.bf16.msra.mxu0 %v268
    %284 = vmatpush.bf16.msra.mxu0 %v267
    %285 = vmatpush.bf16.msra.mxu0 %v266
    %286 = vmatpush.bf16.msra.mxu0 %v265
    %287 = vmatpush.bf16.msra.mxu0 %v264
    %288 = vmatmul.bf16.gmra.mxu0 %v211
    %v289 = vpop.f32.mrf.mxu0
    %v290 = vadd.f32 %v230, %v289
    %v291 = vpop.f32.mrf.mxu0
    %v292 = vadd.f32 %v230, %v291
    %293 = vdwg.mxu0
    %v294 = vpack.c.bf16 %v290, %v290
    %v295 = vpack.c.bf16 %v292, %v292
    %v298 = vrot.slane %v294, 3
    %v299 = vrot.slane %v295, 3
    %vm300 = vcmask 1040384
    %v303 = vsel %vm300, %v294, %v298
    %vm304 = vcmask 1041409
    %v305 = vsel %vm304, %v294, %v298
    %v307 = vrot.slane %v305, 1
    %vm308 = vcmask 1042434
    %v309 = vsel %vm308, %v294, %v298
    %v311 = vrot.slane %v309, 2
    %vm312 = vcmask 1043459
    %v313 = vsel %vm312, %v294, %v298
    %v315 = vrot.slane %v313, 3
    %v318 = vsel %vm300, %v295, %v299
    %v319 = vsel %vm304, %v295, %v299
    %v321 = vrot.slane %v319, 1
    %v322 = vsel %vm308, %v295, %v299
    %v324 = vrot.slane %v322, 2
    %v325 = vsel %vm312, %v295, %v299
    %v327 = vrot.slane %v325, 3
    %336 = vst [vmem:[#allocation10] sm:$0x1] %v303
    %337 = vst [vmem:[#allocation10 + $0x1] sm:$0x1] %v307
    %338 = vst [vmem:[#allocation10 + $0x2] sm:$0x1] %v311
    %339 = vst [vmem:[#allocation10 + $0x3] sm:$0x1] %v315
    %340 = vst [vmem:[#allocation10 + $0x4] sm:$0x1] %v318
    %341 = vst [vmem:[#allocation10 + $0x5] sm:$0x1] %v321
    %342 = vst [vmem:[#allocation10 + $0x6] sm:$0x1] %v324
    %343 = vst [vmem:[#allocation10 + $0x7] sm:$0x1] %v327
    // Predicated region
    $region46: #{tpu_custom_call.1} parent=1 // pred_check
      _
    $region47: #{tpu_custom_call.1} parent=1 // pred_check_branch
      %345 = sbr.rel (0) target = $region49
    $region48: #{tpu_custom_call.1} parent=1 // pred_region
      %347 = vsyncadd [#allocation4], 112
      %s348 = sshll.u32 [#allocation10], 4
      %s349 = int_to_ptr.vmem [resolvable:$true] %s348
      %s350 = sshll.u32 %s7, 4
      %s351 = int_to_ptr.hbm [resolvable:$true] %s350
      %356 = dma.vmem_to_hbm [thread:$0]  %s349, 16, %s351, [#allocation4], 16, 16, 1
    $region49: #{tpu_custom_call.1} parent=1 // pred_fallthru
      _
    // Predicated region
    $region50: #{tpu_custom_call.1} parent=1 // pred_check
      _
    $region51: #{tpu_custom_call.1} parent=1 // pred_check_branch
      %358 = sbr.rel (0) target = $region53
    $region52: #{tpu_custom_call.1} parent=1 // pred_region
      %360 = dma.done [#allocation4], 128
    $region53: #{tpu_custom_call.1} parent=1 // pred_fallthru
      _
    %361 = vsyncpa [#allocation3], 1
    %362 = vsyncpa [#allocation6], 1
    %363 = vsyncpa [#allocation9], 1
    %364 = vsyncpa [#allocation4], 1

</llo_original>
